<compile_context>
chip_gen: v7x
topology: tpu7x:2x2x1
jax: 0.10.0
libtpu: 0.0.40
codegen_flags: <defaults>
</compile_context>

<pallas_src>
import jax
import jax.numpy as jnp
from jax import lax
from jax.experimental import pallas as pl
from jax.experimental.pallas import tpu as pltpu


def _round_up(n, m):
    return (n + m - 1) // m * m


def _reorder_gates(w, H):
    """PyTorch LSTM packs gates along dim 0 as (i, f, g, o); reorder to
    (i, f, o, g) so all sigmoid gates are contiguous."""
    return jnp.concatenate([w[0:H], w[H:2 * H], w[3 * H:4 * H], w[2 * H:3 * H]],
                           axis=0)


def _pad_gate_blocks(wT, H, Hp):
    """wT: (rows, 4H) with gate-major columns (i,f,o,g); zero-pad each gate
    block from H to Hp columns -> (rows, 4*Hp)."""
    parts = [jnp.pad(wT[:, k * H:(k + 1) * H], ((0, 0), (0, Hp - H)))
             for k in range(4)]
    return jnp.concatenate(parts, axis=1)


def lstm_last_linear_kernel(tmax_ref, xw_ref, len_ref, b_ref, whh_ref,
                            wout_ref, bout_ref, y_ref):
    """Grid = (batch_tiles,); the whole recurrence runs inside one invocation.

    tmax_ref: (1,) int32 in SMEM (scalar prefetch)  -- max(lengths)
    xw_ref  : (T, BB, 4*Hp) bf16  -- precomputed x @ W_ih, time-major, resident
    len_ref : (BB, 1) int32
    b_ref   : (1, 4*Hp) f32       -- combined LSTM bias (b_ih + b_hh)
    whh_ref : (Hp, 4*Hp) f32      (resident)
    wout_ref: (Hp, Op) f32        (resident)
    bout_ref: (1, Op) f32         (resident)
    y_ref   : (BB, Op) f32
    """
    Hp = whh_ref.shape[0]
    BB = len_ref.shape[0]
    tmax = tmax_ref[0]

    whh = whh_ref[...]
    bias = b_ref[...]
    lens = len_ref[...]

    def step(t, carry):
        h, c = carry
        # Only the recurrent matmul is on the serial critical path; the input
        # projection for timestep t is a bf16 VMEM read cast back to f32.
        gates = (xw_ref[t].astype(jnp.float32) + bias
                 + jnp.dot(h, whh, preferred_element_type=jnp.float32))
        # Gate order (i, f, o, g): one sigmoid over 3*Hp lanes, one tanh over Hp.
        ifo = jax.nn.sigmoid(gates[:, :3 * Hp])
        g_g = jnp.tanh(gates[:, 3 * Hp:])
        i_g = ifo[:, :Hp]
        f_g = ifo[:, Hp:2 * Hp]
        o_g = ifo[:, 2 * Hp:]
        c_new = f_g * c + i_g * g_g
        h_new = o_g * jnp.tanh(c_new)
        # pack_padded_sequence semantics: freeze the state once t >= length so
        # the carry ends as the hidden state at the last valid timestep per row.
        valid = t < lens                     # (BB, 1) bool, broadcasts over Hp
        return (jnp.where(valid, h_new, h), jnp.where(valid, c_new, c))

    h0 = jnp.zeros((BB, Hp), jnp.float32)
    c0 = jnp.zeros((BB, Hp), jnp.float32)
    h_fin, _ = lax.fori_loop(0, tmax, step, (h0, c0))

    # TODO(synk): nn.Dropout(0.2) is eval-mode identity (no PRNG mask applied).
    y_ref[...] = (jnp.dot(h_fin, wout_ref[...],
                          preferred_element_type=jnp.float32)
                  + bout_ref[...])


def auvi_subnet_forward(x, lengths, params):
    """x: (B, T, D) float32 batch-first; lengths: (B,) int32. Returns (B, O)."""
    B, T, D = x.shape
    H = params["w_hh"].shape[1]
    O = params["w_out"].shape[0]
    f32, bf16 = jnp.float32, jnp.bfloat16

    # Lane/sublane alignment: H, O -> multiples of 128; batch -> multiple of 8.
    Hp = _round_up(H, 128)
    Op = _round_up(O, 128)
    Bp = _round_up(B, 8)

    # Batch tile: when Bp >= 16, pick the largest divisor (multiple of 8,
    # <= 128) that yields >= 2 tiles, so the "parallel" axis can shard across
    # TensorCores (v7x megacore).  Single tile otherwise.
    BB = Bp
    if Bp >= 16:
        BB = 8
        for cand in range(8, min(Bp // 2, 128) + 1, 8):
            if Bp % cand == 0:
                BB = cand

    # Gate reorder (i,f,g,o)->(i,f,o,g), transpose, per-gate zero padding.
    w_ih_T = _pad_gate_blocks(_reorder_gates(params["w_ih"], H).T, H, Hp)   # (D, 4Hp)
    w_hh_T = _pad_gate_blocks(_reorder_gates(params["w_hh"], H).T, H, Hp)   # (H, 4Hp)
    w_hh_T = jnp.pad(w_hh_T, ((0, Hp - H), (0, 0)))                         # (Hp, 4Hp)
    b_comb = _pad_gate_blocks(
        _reorder_gates(params["b_ih"] + params["b_hh"], H).reshape(1, 4 * H),
        H, Hp)                                                               # (1, 4Hp)
    w_out_T = jnp.pad(params["w_out"].T, ((0, Hp - H), (0, Op - O)))         # (Hp, Op)
    b_out = jnp.pad(params["b_out"].reshape(1, O), ((0, 0), (0, Op - O)))    # (1, Op)

    # Hoisted input projection: one f32 MXU matmul over all timesteps in
    # time-major layout (no large transposed output copy), stored bf16 to
    # halve HBM traffic of the (T, Bp, 4Hp) tensor.  Bias is added in-kernel
    # in f32 to avoid quantizing it.
    x_p = jnp.pad(x.astype(f32), ((0, Bp - B), (0, 0), (0, 0)))              # (Bp, T, D)
    x_tm = jnp.transpose(x_p, (1, 0, 2))                                     # (T, Bp, D)
    xw = jnp.einsum("tbd,dg->tbg", x_tm, w_ih_T,
                    preferred_element_type=f32).astype(bf16)                 # (T, Bp, 4Hp)

    len_p = jnp.pad(lengths.astype(jnp.int32), (0, Bp - B)).reshape(Bp, 1)   # (Bp, 1)
    t_max = jnp.minimum(jnp.max(len_p), T).astype(jnp.int32).reshape(1)      # (1,)

    grid = (Bp // BB,)

    # VMEM budget from the actual (double-buffered) blocks, capped at 48 MiB.
    vmem_est = (2 * (T * BB * 4 * Hp * 2)        # xw (bf16), resident per tile
                + 2 * (BB * 4)                   # lengths
                + 2 * (4 * Hp * 4)               # combined LSTM bias
                + 2 * (Hp * 4 * Hp * 4)          # W_hh (f32)
                + 2 * (Hp * Op * 4)              # W_out (f32)
                + 2 * (Op * 4)                   # b_out
                + 2 * (BB * Op * 4))             # y block
    vmem_limit = int(min(max(2 * vmem_est, 16 << 20), 48 << 20))
    # TODO(synk): for very long T the resident xw block should be streamed in
    # timestep chunks (manual double-buffer / emit_pipeline) instead.

    out = pl.pallas_call(
        lstm_last_linear_kernel,
        out_shape=jax.ShapeDtypeStruct((Bp, Op), f32),
        grid_spec=pltpu.PrefetchScalarGridSpec(
            num_scalar_prefetch=1,
            grid=grid,
            in_specs=[
                pl.BlockSpec((T, BB, 4 * Hp), lambda b, tm: (0, b, 0)),  # xW, resident
                pl.BlockSpec((BB, 1), lambda b, tm: (b, 0)),             # lengths
                pl.BlockSpec((1, 4 * Hp), lambda b, tm: (0, 0)),         # LSTM bias
                pl.BlockSpec((Hp, 4 * Hp), lambda b, tm: (0, 0)),        # W_hh resident
                pl.BlockSpec((Hp, Op), lambda b, tm: (0, 0)),            # W_out resident
                pl.BlockSpec((1, Op), lambda b, tm: (0, 0)),             # b_out resident
            ],
            out_specs=pl.BlockSpec((BB, Op), lambda b, tm: (b, 0)),
        ),
        compiler_params=pltpu.CompilerParams(
            dimension_semantics=("parallel",),
            vmem_limit_bytes=vmem_limit,
        ),
    )(t_max, xw, len_p, b_comb, w_hh_T, w_out_T, b_out)

    return out[:B, :O]


def init_params(key, in_size, hidden_size, out_size):
    """Deterministic synthetic parameters with PyTorch LSTM/Linear shapes."""
    k = jax.random.split(key, 6)
    H = hidden_size
    return {
        "w_ih": jax.random.normal(k[0], (4 * H, in_size), jnp.float32) * 0.1,
        "w_hh": jax.random.normal(k[1], (4 * H, H), jnp.float32) * 0.1,
        "b_ih": jax.random.normal(k[2], (4 * H,), jnp.float32) * 0.1,
        "b_hh": jax.random.normal(k[3], (4 * H,), jnp.float32) * 0.1,
        "w_out": jax.random.normal(k[4], (out_size, H), jnp.float32) * 0.1,
        "b_out": jax.random.normal(k[5], (out_size,), jnp.float32) * 0.1,
    }


def reference_forward(x, lengths, params):
    """Pure-JAX f32 reference with PyTorch gate order (i, f, g, o)."""
    B, T, D = x.shape
    H = params["w_hh"].shape[1]
    w_ih_T = params["w_ih"].T
    w_hh_T = params["w_hh"].T
    b = params["b_ih"] + params["b_hh"]

    def step(carry, xs):
        h, c = carry
        x_t, t = xs
        gates = x_t @ w_ih_T + h @ w_hh_T + b
        i_g = jax.nn.sigmoid(gates[:, 0:H])
        f_g = jax.nn.sigmoid(gates[:, H:2 * H])
        g_g = jnp.tanh(gates[:, 2 * H:3 * H])
        o_g = jax.nn.sigmoid(gates[:, 3 * H:4 * H])
        c_new = f_g * c + i_g * g_g
        h_new = o_g * jnp.tanh(c_new)
        valid = (t < lengths)[:, None]
        h = jnp.where(valid, h_new, h)
        c = jnp.where(valid, c_new, c)
        return (h, c), None

    init = (jnp.zeros((B, H), jnp.float32), jnp.zeros((B, H), jnp.float32))
    (h_fin, _), _ = lax.scan(step, init,
                             (jnp.transpose(x, (1, 0, 2)), jnp.arange(T)))
    return h_fin @ params["w_out"].T + params["b_out"]


if __name__ == "__main__":
    B, T, D, H, O = 2, 8, 16, 32, 16
    key = jax.random.PRNGKey(0)
    kx, kp = jax.random.split(key)
    x = jax.random.normal(kx, (B, T, D), jnp.float32)
    lengths = jnp.array([8, 5], dtype=jnp.int32)
    params = init_params(kp, D, H, O)

    y = auvi_subnet_forward(x, lengths, params)
    y = jax.block_until_ready(y)

    y_ref = reference_forward(x, lengths, params)
    assert y.shape == (B, O)
    max_err = float(jnp.max(jnp.abs(y - y_ref)))
    # Only bf16 storage of the hoisted input projection quantizes anything;
    # all matmuls/state math are f32.
    assert max_err < 2e-2, f"mismatch vs reference: max abs err {max_err}"
    print("KERNEL_OK")
</pallas_src>

<mosaic_0001>
module attributes {stable_mosaic.version = 11 : i64} {
  func.func @lstm_last_linear_kernel(%arg0: i32, %arg1: memref<1xi32, #tpu.memory_space<smem>>, %arg2: memref<8x8x512xbf16, #tpu.memory_space<vmem>>, %arg3: memref<8x1xi32, #tpu.memory_space<vmem>>, %arg4: memref<1x512xf32, #tpu.memory_space<vmem>>, %arg5: memref<128x512xf32, #tpu.memory_space<vmem>>, %arg6: memref<128x128xf32, #tpu.memory_space<vmem>>, %arg7: memref<1x128xf32, #tpu.memory_space<vmem>>, %arg8: memref<8x128xf32, #tpu.memory_space<vmem>>) attributes {dimension_semantics = [#tpu.dimension_semantics<parallel>], iteration_bounds = array<i64: 1>, scalar_prefetch = 1 : i64, scratch_operands = 0 : i64, tpu.core_type = #tpu.core_type<tc>, window_params = [{transform_indices = @transform_0, window_bounds = array<i64: 8, 8, 512>}, {transform_indices = @transform_1, window_bounds = array<i64: 8, 1>}, {pipeline_mode = #tpu.pipeline_mode<synchronous>, transform_indices = @transform_2, window_bounds = array<i64: 1, 512>}, {pipeline_mode = #tpu.pipeline_mode<synchronous>, transform_indices = @transform_3, window_bounds = array<i64: 128, 512>}, {pipeline_mode = #tpu.pipeline_mode<synchronous>, transform_indices = @transform_4, window_bounds = array<i64: 128, 128>}, {pipeline_mode = #tpu.pipeline_mode<synchronous>, transform_indices = @transform_5, window_bounds = array<i64: 1, 128>}, {transform_indices = @transform_6, window_bounds = array<i64: 8, 128>}]} {
    %c0 = arith.constant 0 : index
    %0 = memref.load %arg1[%c0] : memref<1xi32, #tpu.memory_space<smem>>
    %c0_0 = arith.constant 0 : index
    %c0_1 = arith.constant 0 : index
    %1 = vector.load %arg5[%c0_0, %c0_1] : memref<128x512xf32, #tpu.memory_space<vmem>>, vector<128x512xf32>
    %c0_2 = arith.constant 0 : index
    %c0_3 = arith.constant 0 : index
    %2 = vector.load %arg4[%c0_2, %c0_3] : memref<1x512xf32, #tpu.memory_space<vmem>>, vector<1x512xf32>
    %c0_4 = arith.constant 0 : index
    %c0_5 = arith.constant 0 : index
    %3 = vector.load %arg3[%c0_4, %c0_5] : memref<8x1xi32, #tpu.memory_space<vmem>>, vector<8x1xi32>
    %cst = arith.constant 0.000000e+00 : f32
    %4 = vector.broadcast %cst : f32 to vector<8x128xf32>
    %cst_6 = arith.constant 0.000000e+00 : f32
    %5 = vector.broadcast %cst_6 : f32 to vector<8x128xf32>
    %c0_i32 = arith.constant 0 : i32
    %6 = arith.subi %0, %c0_i32 : i32
    %7 = arith.addi %c0_i32, %6 : i32
    %c1_i32 = arith.constant 1 : i32
    %8:2 = scf.for %arg9 = %c0_i32 to %7 step %c1_i32 iter_args(%arg10 = %4, %arg11 = %5) -> (vector<8x128xf32>, vector<8x128xf32>)  : i32 {
      %15 = arith.index_cast %arg9 : i32 to index
      %c0_14 = arith.constant 0 : index
      %c0_15 = arith.constant 0 : index
      %16 = vector.load %arg2[%15, %c0_14, %c0_15] : memref<8x8x512xbf16, #tpu.memory_space<vmem>>, vector<1x8x512xbf16>
      %17 = vector.shape_cast %16 : vector<1x8x512xbf16> to vector<8x512xbf16>
      %18 = arith.extf %17 : vector<8x512xbf16> to vector<8x512xf32>
      %19 = vector.broadcast %2 : vector<1x512xf32> to vector<8x512xf32>
      %20 = arith.addf %18, %19 : vector<8x512xf32>
      %cst_16 = arith.constant dense<0.000000e+00> : vector<8x512xf32>
      %21 = tpu.matmul %arg10, %1, %cst_16 {dimension_numbers = #tpu.dot_dimension_numbers<[1], [0], [0], [1], [0, 0, 1, 1], [], []>} : vector<8x128xf32>, vector<128x512xf32>, vector<8x512xf32> -> vector<8x512xf32>
      %22 = arith.addf %20, %21 : vector<8x512xf32>
      %23 = vector.extract_strided_slice %22 {offsets = [0, 0], sizes = [8, 384], strides = [1, 1]} : vector<8x512xf32> to vector<8x384xf32>
      %24 = arith.negf %23 : vector<8x384xf32>
      %25 = math.exp %24 : vector<8x384xf32>
      %cst_17 = arith.constant 1.000000e+00 : f32
      %26 = vector.broadcast %cst_17 : f32 to vector<8x384xf32>
      %27 = arith.addf %26, %25 : vector<8x384xf32>
      %28 = arith.divf %26, %27 : vector<8x384xf32>
      %29 = vector.extract_strided_slice %22 {offsets = [0, 384], sizes = [8, 128], strides = [1, 1]} : vector<8x512xf32> to vector<8x128xf32>
      %30 = math.tanh %29 : vector<8x128xf32>
      %31 = vector.extract_strided_slice %28 {offsets = [0, 0], sizes = [8, 128], strides = [1, 1]} : vector<8x384xf32> to vector<8x128xf32>
      %32 = vector.extract_strided_slice %28 {offsets = [0, 128], sizes = [8, 128], strides = [1, 1]} : vector<8x384xf32> to vector<8x128xf32>
      %33 = vector.extract_strided_slice %28 {offsets = [0, 256], sizes = [8, 128], strides = [1, 1]} : vector<8x384xf32> to vector<8x128xf32>
      %34 = arith.mulf %32, %arg11 : vector<8x128xf32>
      %35 = arith.mulf %31, %30 : vector<8x128xf32>
      %36 = arith.addf %34, %35 : vector<8x128xf32>
      %37 = math.tanh %36 : vector<8x128xf32>
      %38 = arith.mulf %33, %37 : vector<8x128xf32>
      %39 = vector.broadcast %arg9 : i32 to vector<8x1xi32>
      %40 = arith.cmpi slt, %39, %3 : vector<8x1xi32>
      %41 = vector.shape_cast %40 : vector<8x1xi1> to vector<8x1xi1>
      %42 = vector.broadcast %41 : vector<8x1xi1> to vector<8x128xi1>
      %43 = arith.select %42, %38, %arg10 : vector<8x128xi1>, vector<8x128xf32>
      %44 = vector.shape_cast %40 : vector<8x1xi1> to vector<8x1xi1>
      %45 = vector.broadcast %44 : vector<8x1xi1> to vector<8x128xi1>
      %46 = arith.select %45, %36, %arg11 : vector<8x128xi1>, vector<8x128xf32>
      scf.yield %43, %46 : vector<8x128xf32>, vector<8x128xf32>
    }
    %c0_7 = arith.constant 0 : index
    %c0_8 = arith.constant 0 : index
    %9 = vector.load %arg6[%c0_7, %c0_8] : memref<128x128xf32, #tpu.memory_space<vmem>>, vector<128x128xf32>
    %cst_9 = arith.constant dense<0.000000e+00> : vector<8x128xf32>
    %10 = tpu.matmul %8#0, %9, %cst_9 {dimension_numbers = #tpu.dot_dimension_numbers<[1], [0], [0], [1], [0, 0, 1, 1], [], []>} : vector<8x128xf32>, vector<128x128xf32>, vector<8x128xf32> -> vector<8x128xf32>
    %c0_10 = arith.constant 0 : index
    %c0_11 = arith.constant 0 : index
    %11 = vector.load %arg7[%c0_10, %c0_11] : memref<1x128xf32, #tpu.memory_space<vmem>>, vector<1x128xf32>
    %12 = vector.broadcast %11 : vector<1x128xf32> to vector<8x128xf32>
    %13 = arith.addf %10, %12 : vector<8x128xf32>
    %c0_12 = arith.constant 0 : index
    %c0_13 = arith.constant 0 : index
    %14 = vector.load %arg8[%c0_12, %c0_13] : memref<8x128xf32, #tpu.memory_space<vmem>>, vector<8x128xf32>
    tpu.vector_store %arg8[%c0_12, %c0_13], %13 {strides = array<i32>} : memref<8x128xf32, #tpu.memory_space<vmem>>, vector<8x128xf32>,
    return
  }
  func.func @transform_0(%arg0: i32, %arg1: memref<1xi32, #tpu.memory_space<smem>>) -> (i32, i32, i32) {
    %c0_i32 = arith.constant 0 : i32
    %c0_i32_0 = arith.constant 0 : i32
    %c0_i32_1 = arith.constant 0 : i32
    return %c0_i32, %arg0, %c0_i32_0 : i32, i32, i32
  }
  func.func @transform_1(%arg0: i32, %arg1: memref<1xi32, #tpu.memory_space<smem>>) -> (i32, i32) {
    %c0_i32 = arith.constant 0 : i32
    %c0_i32_0 = arith.constant 0 : i32
    return %arg0, %c0_i32 : i32, i32
  }
  func.func @transform_2(%arg0: i32, %arg1: memref<1xi32, #tpu.memory_space<smem>>) -> (i32, i32) {
    %c0_i32 = arith.constant 0 : i32
    %c0_i32_0 = arith.constant 0 : i32
    %c0_i32_1 = arith.constant 0 : i32
    return %c0_i32, %c0_i32_0 : i32, i32
  }
  func.func @transform_3(%arg0: i32, %arg1: memref<1xi32, #tpu.memory_space<smem>>) -> (i32, i32) {
    %c0_i32 = arith.constant 0 : i32
    %c0_i32_0 = arith.constant 0 : i32
    %c0_i32_1 = arith.constant 0 : i32
    return %c0_i32, %c0_i32_0 : i32, i32
  }
  func.func @transform_4(%arg0: i32, %arg1: memref<1xi32, #tpu.memory_space<smem>>) -> (i32, i32) {
    %c0_i32 = arith.constant 0 : i32
    %c0_i32_0 = arith.constant 0 : i32
    %c0_i32_1 = arith.constant 0 : i32
    return %c0_i32, %c0_i32_0 : i32, i32
  }
  func.func @transform_5(%arg0: i32, %arg1: memref<1xi32, #tpu.memory_space<smem>>) -> (i32, i32) {
    %c0_i32 = arith.constant 0 : i32
    %c0_i32_0 = arith.constant 0 : i32
    %c0_i32_1 = arith.constant 0 : i32
    return %c0_i32, %c0_i32_0 : i32, i32
  }
  func.func @transform_6(%arg0: i32, %arg1: memref<1xi32, #tpu.memory_space<smem>>) -> (i32, i32) {
    %c0_i32 = arith.constant 0 : i32
    %c0_i32_0 = arith.constant 0 : i32
    return %arg0, %c0_i32 : i32, i32
  }
}

</mosaic_0001>

<llo_original>
// kernel: tpu_custom_call.1
$region0: #{tpu_custom_call.1}
  #allocation0 [shape = 'u32[]', space=smem, size = 0x4, offset = 0x4, fixed_abs, tag = 'smem constant byte address 0x4 - core index']
  #allocation1 [shape = 'u32[144,128]{1,0:T(1,128)}', space=vmem, size = 0x12000, scoped, tag = 'internal scratch']
  #allocation2 [shape = 's32[1]{0}', space=sflag, size = 0x4, scoped, tag = 'scoped memory for tpu_custom_call.1']
  #allocation3 [shape = 's32[1]{0:T(128)S(6)}', space=smem, size = 0x200, scoped, tag = 'prefetched SMEM operand 0']
  %s0 = inlined_call_operand.<no memory space> [shape: s32[1], index: 0, kind: input, shape index: {}]
  %s1 = inlined_call_operand.hbm [shape: bf16[8,8,512], index: 1, kind: input, shape index: {}]
  %s2 = inlined_call_operand.vmem [shape: s32[8,1], index: 2, kind: input, shape index: {}]
  %s3 = inlined_call_operand.vmem [shape: f32[1,512], index: 3, kind: input, shape index: {}]
  %s4 = inlined_call_operand.hbm [shape: f32[128,512], index: 4, kind: input, shape index: {}]
  %s5 = inlined_call_operand.hbm [shape: f32[128,128], index: 5, kind: input, shape index: {}]
  %s6 = inlined_call_operand.vmem [shape: f32[1,128], index: 6, kind: input, shape index: {}]
  %s7 = inlined_call_operand.hbm [shape: f32[8,128], index: 7, kind: output, shape index: {}]
  %s8 = sld [smem:[#allocation0]]
  $region53: #{tpu_custom_call.1} parent=0
    _
  %s10 = ssub.s32 1, %s8
  %s11 = scalar_select 0, %s10, %s8
  %12 = sst [smem:[#allocation3]] %s0
  $region1: #{tpu_custom_call.1} parent=0
    #allocation4 [shape = 'u8[65536]{0}', space=vmem, size = 0x10000, scoped, tag = 'input window, operand 1, single buffered']
    #allocation5 [shape = 's32[1]{0}', space=sflag, size = 0x4, scoped, tag = 'scoped memory for tpu_custom_call.1']
    #allocation6 [shape = 's32[1]{0}', space=sflag, size = 0x4, scoped, tag = 'scoped memory for tpu_custom_call.1']
    #allocation7 [shape = 'u8[262144]{0}', space=vmem, size = 0x40000, scoped, tag = 'input window, operand 4, single buffered']
    #allocation8 [shape = 's32[1]{0}', space=sflag, size = 0x4, scoped, tag = 'scoped memory for tpu_custom_call.1']
    #allocation9 [shape = 'u8[65536]{0}', space=vmem, size = 0x10000, scoped, tag = 'input window, operand 5, single buffered']
    #allocation10 [shape = 'u8[4096]{0}', space=vmem, size = 0x1000, scoped, tag = 'output window, operand 0, single buffered']
    %13 = vsyncpa [#allocation5], 0
    %14 = vsyncpa [#allocation8], 0
    %15 = vsyncpa [#allocation6], 0
    // Predicated region
    $region2: #{tpu_custom_call.1} parent=1 // pred_check
      _
    $region3: #{tpu_custom_call.1} parent=1 // pred_check_branch
      %17 = sbr.rel (0) target = $region5
    $region4: #{tpu_custom_call.1} parent=1 // pred_region
      %s19 = ssub.s32 2048, 2048
      %20 = vsyncadd [#allocation5], %s19
      %s21 = sshll.u32 [#allocation4], 4
      %s22 = int_to_ptr.vmem [resolvable:$true] %s21
      %27 = dma.hbm_to_vmem [thread:$0]  %s1, 2048, %s22, [#allocation5], 256, 256, 16
    $region5: #{tpu_custom_call.1} parent=1 // pred_fallthru
      _
    // Predicated region
    $region6: #{tpu_custom_call.1} parent=1 // pred_check
      _
    $region7: #{tpu_custom_call.1} parent=1 // pred_check_branch
      %29 = sbr.rel (0) target = $region9
    $region8: #{tpu_custom_call.1} parent=1 // pred_region
      _
    $region9: #{tpu_custom_call.1} parent=1 // pred_fallthru
      _
    // Predicated region
    $region10: #{tpu_custom_call.1} parent=1 // pred_check
      _
    $region11: #{tpu_custom_call.1} parent=1 // pred_check_branch
      %31 = sbr.rel (0) target = $region13
    $region12: #{tpu_custom_call.1} parent=1 // pred_region
      _
    $region13: #{tpu_custom_call.1} parent=1 // pred_fallthru
      _
    // Predicated region
    $region14: #{tpu_custom_call.1} parent=1 // pred_check
      _
    $region15: #{tpu_custom_call.1} parent=1 // pred_check_branch
      %33 = sbr.rel (0) target = $region17
    $region16: #{tpu_custom_call.1} parent=1 // pred_region
      %s35 = ssub.s32 8192, 8192
      %36 = vsyncadd [#allocation8], %s35
      %s37 = sshll.u32 [#allocation7], 4
      %s38 = int_to_ptr.vmem [resolvable:$true] %s37
      %43 = dma.hbm_to_vmem [thread:$0]  %s4, 8192, %s38, [#allocation8], 512, 512, 32
    $region17: #{tpu_custom_call.1} parent=1 // pred_fallthru
      _
    // Predicated region
    $region18: #{tpu_custom_call.1} parent=1 // pred_check
      _
    $region19: #{tpu_custom_call.1} parent=1 // pred_check_branch
      %45 = sbr.rel (0) target = $region21
    $region20: #{tpu_custom_call.1} parent=1 // pred_region
      %s47 = ssub.s32 2048, 2048
      %48 = vsyncadd [#allocation8], %s47
      %s49 = sshll.u32 [#allocation9], 4
      %s50 = int_to_ptr.vmem [resolvable:$true] %s49
      %55 = dma.hbm_to_vmem [thread:$0]  %s5, 2048, %s50, [#allocation8], 128, 128, 8
    $region21: #{tpu_custom_call.1} parent=1 // pred_fallthru
      _
    // Predicated region
    $region22: #{tpu_custom_call.1} parent=1 // pred_check
      _
    $region23: #{tpu_custom_call.1} parent=1 // pred_check_branch
      %57 = sbr.rel (0) target = $region25
    $region24: #{tpu_custom_call.1} parent=1 // pred_region
      _
    $region25: #{tpu_custom_call.1} parent=1 // pred_fallthru
      _
    // Predicated region
    $region26: #{tpu_custom_call.1} parent=1 // pred_check
      _
    $region27: #{tpu_custom_call.1} parent=1 // pred_check_branch
      %59 = sbr.rel (0) target = $region29
    $region28: #{tpu_custom_call.1} parent=1 // pred_region
      %60 = dma.done [#allocation5], 2048
    $region29: #{tpu_custom_call.1} parent=1 // pred_fallthru
      _
    // Predicated region
    $region30: #{tpu_custom_call.1} parent=1 // pred_check
      _
    $region31: #{tpu_custom_call.1} parent=1 // pred_check_branch
      %62 = sbr.rel (0) target = $region33
    $region32: #{tpu_custom_call.1} parent=1 // pred_region
      %63 = dma.done [#allocation8], 8192
    $region33: #{tpu_custom_call.1} parent=1 // pred_fallthru
      _
    // Predicated region
    $region34: #{tpu_custom_call.1} parent=1 // pred_check
      _
    $region35: #{tpu_custom_call.1} parent=1 // pred_check_branch
      %65 = sbr.rel (0) target = $region37
    $region36: #{tpu_custom_call.1} parent=1 // pred_region
      %66 = dma.done [#allocation8], 2048
    $region37: #{tpu_custom_call.1} parent=1 // pred_fallthru
      _
    %s67 = sld [smem:[#allocation3]]
    %v68 = vld [vmem:[#allocation7] sm:$0xff]
    %v69 = vld [vmem:[#allocation7 + $0x8] sm:$0xff]
    %v70 = vld [vmem:[#allocation7 + $0x10] sm:$0xff]
    %v71 = vld [vmem:[#allocation7 + $0x18] sm:$0xff]
    %v72 = vld [vmem:[#allocation7 + $0x20] sm:$0xff]
    %v73 = vld [vmem:[#allocation7 + $0x28] sm:$0xff]
    %v74 = vld [vmem:[#allocation7 + $0x30] sm:$0xff]
    %v75 = vld [vmem:[#allocation7 + $0x38] sm:$0xff]
    %v76 = vld [vmem:[#allocation7 + $0x40] sm:$0xff]
    %v77 = vld [vmem:[#allocation7 + $0x48] sm:$0xff]
    %v78 = vld [vmem:[#allocation7 + $0x50] sm:$0xff]
    %v79 = vld [vmem:[#allocation7 + $0x58] sm:$0xff]
    %v80 = vld [vmem:[#allocation7 + $0x60] sm:$0xff]
    %v81 = vld [vmem:[#allocation7 + $0x68] sm:$0xff]
    %v82 = vld [vmem:[#allocation7 + $0x70] sm:$0xff]
    %v83 = vld [vmem:[#allocation7 + $0x78] sm:$0xff]
    %v84 = vld [vmem:[#allocation7 + $0x80] sm:$0xff]
    %v85 = vld [vmem:[#allocation7 + $0x88] sm:$0xff]
    %v86 = vld [vmem:[#allocation7 + $0x90] sm:$0xff]
    %v87 = vld [vmem:[#allocation7 + $0x98] sm:$0xff]
    %v88 = vld [vmem:[#allocation7 + $0xa0] sm:$0xff]
    %v89 = vld [vmem:[#allocation7 + $0xa8] sm:$0xff]
    %v90 = vld [vmem:[#allocation7 + $0xb0] sm:$0xff]
    %v91 = vld [vmem:[#allocation7 + $0xb8] sm:$0xff]
    %v92 = vld [vmem:[#allocation7 + $0xc0] sm:$0xff]
    %v93 = vld [vmem:[#allocation7 + $0xc8] sm:$0xff]
    %v94 = vld [vmem:[#allocation7 + $0xd0] sm:$0xff]
    %v95 = vld [vmem:[#allocation7 + $0xd8] sm:$0xff]
    %v96 = vld [vmem:[#allocation7 + $0xe0] sm:$0xff]
    %v97 = vld [vmem:[#allocation7 + $0xe8] sm:$0xff]
    %v98 = vld [vmem:[#allocation7 + $0xf0] sm:$0xff]
    %v99 = vld [vmem:[#allocation7 + $0xf8] sm:$0xff]
    %v100 = vld [vmem:[#allocation7 + $0x100] sm:$0xff]
    %v101 = vld [vmem:[#allocation7 + $0x108] sm:$0xff]
    %v102 = vld [vmem:[#allocation7 + $0x110] sm:$0xff]
    %v103 = vld [vmem:[#allocation7 + $0x118] sm:$0xff]
    %v104 = vld [vmem:[#allocation7 + $0x120] sm:$0xff]
    %v105 = vld [vmem:[#allocation7 + $0x128] sm:$0xff]
    %v106 = vld [vmem:[#allocation7 + $0x130] sm:$0xff]
    %v107 = vld [vmem:[#allocation7 + $0x138] sm:$0xff]
    %v108 = vld [vmem:[#allocation7 + $0x140] sm:$0xff]
    %v109 = vld [vmem:[#allocation7 + $0x148] sm:$0xff]
    %v110 = vld [vmem:[#allocation7 + $0x150] sm:$0xff]
    %v111 = vld [vmem:[#allocation7 + $0x158] sm:$0xff]
    %v112 = vld [vmem:[#allocation7 + $0x160] sm:$0xff]
    %v113 = vld [vmem:[#allocation7 + $0x168] sm:$0xff]
    %v114 = vld [vmem:[#allocation7 + $0x170] sm:$0xff]
    %v115 = vld [vmem:[#allocation7 + $0x178] sm:$0xff]
    %v116 = vld [vmem:[#allocation7 + $0x180] sm:$0xff]
    %v117 = vld [vmem:[#allocation7 + $0x188] sm:$0xff]
    %v118 = vld [vmem:[#allocation7 + $0x190] sm:$0xff]
    %v119 = vld [vmem:[#allocation7 + $0x198] sm:$0xff]
    %v120 = vld [vmem:[#allocation7 + $0x1a0] sm:$0xff]
    %v121 = vld [vmem:[#allocation7 + $0x1a8] sm:$0xff]
    %v122 = vld [vmem:[#allocation7 + $0x1b0] sm:$0xff]
    %v123 = vld [vmem:[#allocation7 + $0x1b8] sm:$0xff]
    %v124 = vld [vmem:[#allocation7 + $0x1c0] sm:$0xff]
    %v125 = vld [vmem:[#allocation7 + $0x1c8] sm:$0xff]
    %v126 = vld [vmem:[#allocation7 + $0x1d0] sm:$0xff]
    %v127 = vld [vmem:[#allocation7 + $0x1d8] sm:$0xff]
    %v128 = vld [vmem:[#allocation7 + $0x1e0] sm:$0xff]
    %v129 = vld [vmem:[#allocation7 + $0x1e8] sm:$0xff]
    %v130 = vld [vmem:[#allocation7 + $0x1f0] sm:$0xff]
    %v131 = vld [vmem:[#allocation7 + $0x1f8] sm:$0xff]
    %v132 = vld [vmem:[%s3] sm:$0xf]
    %v133 = vld [vmem:[%s2] sm:$0xff]
    // While loop
    $region38: #{tpu_custom_call.1} parent=1 // loop_pre_header
      _
    $region39: #{tpu_custom_call.1} parent=1 // loop_header
      %s135 = sphi 0, %s137
      %p136 = scmp.ge.s32.totalorder %s135, %s67
      %v140 = vphi 0.0, %v353
      %v141 = vphi 0.0, %v354
    $region40: #{tpu_custom_call.1} parent=1 // loop_header_branch
      %139 = sbr.rel (%p136) target = $region44
    $region41: #{tpu_custom_call.1} parent=1 // loop_body
      %s142 = smul.u32 %s135, 4
      %s143 = smul.addr %s142, 4
      %s144 = scalar_lea.vmem [#allocation4], %s143
      %v145 = vld [vmem:[%s144] sm:$0xff]
      %v146 = vld [vmem:[%s144 + $0x8] sm:$0xff]
      %v147 = vunpack.c.l.bf16 %v145
      %v148 = vunpack.c.h.bf16 %v145
      %v149 = vunpack.c.l.bf16 %v146
      %v150 = vunpack.c.h.bf16 %v146
      %v152 = vlaneseq
      %v153 = vshrl.u32 %v152, 7
      %v154 = vsub.s32 0, %v153
      %v155 = vrot.slane %v132, %v154
      %v156 = vlaneseq
      %v157 = vshrl.u32 %v156, 7
      %v158 = vsub.s32 1, %v157
      %v159 = vrot.slane %v132, %v158
      %v160 = vlaneseq
      %v161 = vshrl.u32 %v160, 7
      %v162 = vsub.s32 2, %v161
      %v163 = vrot.slane %v132, %v162
      %v164 = vlaneseq
      %v165 = vshrl.u32 %v164, 7
      %v166 = vsub.s32 3, %v165
      %v167 = vrot.slane %v132, %v166
      %v172 = vadd.f32 %v147, %v155
      %v173 = vadd.f32 %v148, %v159
      %v174 = vadd.f32 %v149, %v163
      %v175 = vadd.f32 %v150, %v167
      %176 = vmatprep.subr.mxu0 %v69
      %177 = vmatpush1.msra.mxu0 %v68
      %178 = vmatprep.subr.mxu0 %v73
      %179 = vmatpush1.msra.mxu0 %v72
      %180 = vmatprep.subr.mxu0 %v77
      %181 = vmatpush1.msra.mxu0 %v76
      %182 = vmatprep.subr.mxu0 %v81
      %183 = vmatpush1.msra.mxu0 %v80
      %184 = vmatprep.subr.mxu0 %v85
      %185 = vmatpush1.msra.mxu0 %v84
      %186 = vmatprep.subr.mxu0 %v89
      %187 = vmatpush1.msra.mxu0 %v88
      %188 = vmatprep.subr.mxu0 %v93
      %189 = vmatpush1.msra.mxu0 %v92
      %190 = vmatprep.subr.mxu0 %v97
      %191 = vmatpush1.msra.mxu0 %v96
      %192 = vmatprep.subr.mxu0 %v101
      %193 = vmatpush1.msra.mxu0 %v100
      %194 = vmatprep.subr.mxu0 %v105
      %195 = vmatpush1.msra.mxu0 %v104
      %196 = vmatprep.subr.mxu0 %v109
      %197 = vmatpush1.msra.mxu0 %v108
      %198 = vmatprep.subr.mxu0 %v113
      %199 = vmatpush1.msra.mxu0 %v112
      %200 = vmatprep.subr.mxu0 %v117
      %201 = vmatpush1.msra.mxu0 %v116
      %202 = vmatprep.subr.mxu0 %v121
      %203 = vmatpush1.msra.mxu0 %v120
      %204 = vmatprep.subr.mxu0 %v125
      %205 = vmatpush1.msra.mxu0 %v124
      %206 = vmatprep.subr.mxu0 %v129
      %207 = vmatpush1.msra.mxu0 %v128
      %208 = vmatprep.subr.mxu0 0.0
      %209 = vmatpush1.msra.mxu0 0.0
      %210 = vmatprep.subr.mxu0 0.0
      %211 = vmatpush1.msra.mxu0 0.0
      %212 = vmatprep.subr.mxu0 0.0
      %213 = vmatpush1.msra.mxu0 0.0
      %214 = vmatprep.subr.mxu0 0.0
      %215 = vmatpush1.msra.mxu0 0.0
      %216 = vmatprep.subr.mxu0 0.0
      %217 = vmatpush1.msra.mxu0 0.0
      %218 = vmatprep.subr.mxu0 0.0
      %219 = vmatpush1.msra.mxu0 0.0
      %220 = vmatprep.subr.mxu0 0.0
      %221 = vmatpush1.msra.mxu0 0.0
      %222 = vmatprep.subr.mxu0 0.0
      %223 = vmatpush1.msra.mxu0 0.0
      %224 = vmatprep.subr.mxu0 0.0
      %225 = vmatpush1.msra.mxu0 0.0
      %226 = vmatprep.subr.mxu0 0.0
      %227 = vmatpush1.msra.mxu0 0.0
      %228 = vmatprep.subr.mxu0 0.0
      %229 = vmatpush1.msra.mxu0 0.0
      %230 = vmatprep.subr.mxu0 0.0
      %231 = vmatpush1.msra.mxu0 0.0
      %232 = vmatprep.subr.mxu0 0.0
      %233 = vmatpush1.msra.mxu0 0.0
      %234 = vmatprep.subr.mxu0 0.0
      %235 = vmatpush1.msra.mxu0 0.0
      %236 = vmatprep.subr.mxu0 0.0
      %237 = vmatpush1.msra.mxu0 0.0
      %238 = vmatprep.subr.mxu0 0.0
      %239 = vmatpush1.msra.mxu0 0.0
      %240 = vmatprep.mubr.f32.mxu0 0.0
      %241 = vmatmul.mubr.f32.gmra.mrb[0].mxu0 %v140
      %v242 = vpop.f32.mrb[0].mxu0
      %v243 = vadd.f32 0.0, %v242
      %v244 = vpop.f32.mrb[0].mxu0
      %v245 = vadd.f32 0.0, %v244
      %246 = vdwg.mxu0
      %247 = vmatprep.subr.mxu0 %v71
      %248 = vmatpush1.msra.mxu0 %v70
      %249 = vmatprep.subr.mxu0 %v75
      %250 = vmatpush1.msra.mxu0 %v74
      %251 = vmatprep.subr.mxu0 %v79
      %252 = vmatpush1.msra.mxu0 %v78
      %253 = vmatprep.subr.mxu0 %v83
      %254 = vmatpush1.msra.mxu0 %v82
      %255 = vmatprep.subr.mxu0 %v87
      %256 = vmatpush1.msra.mxu0 %v86
      %257 = vmatprep.subr.mxu0 %v91
      %258 = vmatpush1.msra.mxu0 %v90
      %259 = vmatprep.subr.mxu0 %v95
      %260 = vmatpush1.msra.mxu0 %v94
      %261 = vmatprep.subr.mxu0 %v99
      %262 = vmatpush1.msra.mxu0 %v98
      %263 = vmatprep.subr.mxu0 %v103
      %264 = vmatpush1.msra.mxu0 %v102
      %265 = vmatprep.subr.mxu0 %v107
      %266 = vmatpush1.msra.mxu0 %v106
      %267 = vmatprep.subr.mxu0 %v111
      %268 = vmatpush1.msra.mxu0 %v110
      %269 = vmatprep.subr.mxu0 %v115
      %270 = vmatpush1.msra.mxu0 %v114
      %271 = vmatprep.subr.mxu0 %v119
      %272 = vmatpush1.msra.mxu0 %v118
      %273 = vmatprep.subr.mxu0 %v123
      %274 = vmatpush1.msra.mxu0 %v122
      %275 = vmatprep.subr.mxu0 %v127
      %276 = vmatpush1.msra.mxu0 %v126
      %277 = vmatprep.subr.mxu0 %v131
      %278 = vmatpush1.msra.mxu0 %v130
      %279 = vmatprep.subr.mxu0 0.0
      %280 = vmatpush1.msra.mxu0 0.0
      %281 = vmatprep.subr.mxu0 0.0
      %282 = vmatpush1.msra.mxu0 0.0
      %283 = vmatprep.subr.mxu0 0.0
      %284 = vmatpush1.msra.mxu0 0.0
      %285 = vmatprep.subr.mxu0 0.0
      %286 = vmatpush1.msra.mxu0 0.0
      %287 = vmatprep.subr.mxu0 0.0
      %288 = vmatpush1.msra.mxu0 0.0
      %289 = vmatprep.subr.mxu0 0.0
      %290 = vmatpush1.msra.mxu0 0.0
      %291 = vmatprep.subr.mxu0 0.0
      %292 = vmatpush1.msra.mxu0 0.0
      %293 = vmatprep.subr.mxu0 0.0
      %294 = vmatpush1.msra.mxu0 0.0
      %295 = vmatprep.subr.mxu0 0.0
      %296 = vmatpush1.msra.mxu0 0.0
      %297 = vmatprep.subr.mxu0 0.0
      %298 = vmatpush1.msra.mxu0 0.0
      %299 = vmatprep.subr.mxu0 0.0
      %300 = vmatpush1.msra.mxu0 0.0
      %301 = vmatprep.subr.mxu0 0.0
      %302 = vmatpush1.msra.mxu0 0.0
      %303 = vmatprep.subr.mxu0 0.0
      %304 = vmatpush1.msra.mxu0 0.0
      %305 = vmatprep.subr.mxu0 0.0
      %306 = vmatpush1.msra.mxu0 0.0
      %307 = vmatprep.subr.mxu0 0.0
      %308 = vmatpush1.msra.mxu0 0.0
      %309 = vmatprep.subr.mxu0 0.0
      %310 = vmatpush1.msra.mxu0 0.0
      %311 = vmatprep.mubr.f32.mxu0 0.0
      %312 = vmatmul.mubr.f32.gmra.mrb[0].mxu0 %v140
      %v313 = vpop.f32.mrb[0].mxu0
      %v314 = vadd.f32 0.0, %v313
      %v315 = vpop.f32.mrb[0].mxu0
      %v316 = vadd.f32 0.0, %v315
      %317 = vdwg.mxu0
      %v318 = vadd.f32 %v172, %v243
      %v319 = vadd.f32 %v173, %v245
      %v320 = vadd.f32 %v174, %v314
      %v321 = vadd.f32 %v175, %v316
      %v322 = vxor.u32 %v318, 2147483648
      %v323 = vxor.u32 %v319, 2147483648
      %v324 = vxor.u32 %v320, 2147483648
      %v325 = vmul.f32 %v322, 1.442695
      %v326 = vpow.pop %v325
      %v327 = vmul.f32 %v323, 1.442695
      %v328 = vpow.pop %v327
      %v329 = vmul.f32 %v324, 1.442695
      %v330 = vpow.pop %v329
      %v331 = vadd.f32 %v326, 1.0
      %v332 = vadd.f32 %v328, 1.0
      %v333 = vadd.f32 %v330, 1.0
      %v334 = vrcp.pop %v331
      %v335 = vmul.f32 1.0, %v334
      %v336 = vrcp.pop %v332
      %v337 = vmul.f32 1.0, %v336
      %v338 = vrcp.pop %v333
      %v339 = vmul.f32 1.0, %v338
      %v340 = vtanh.pop %v321
      %v341 = vmul.f32 %v337, %v141
      %v342 = vmul.f32 %v335, %v340
      %v343 = vadd.f32 %v341, %v342
      %v344 = vtanh.pop %v343
      %v345 = vmul.f32 %v339, %v344
      %v346 = vstv %s135
      %vm347 = vcmp.lt.s32.totalorder %v346, %v133
      %v348 = vsel %vm347, 1, 0
      %349 = vset.pattern.permute.xlu0 0
      %350 = vperm.xlu0 %349, %v348
      %v351 = vpop.permute.xlu0 %350
      %vm352 = vcmp.eq.s32.totalorder %v351, 1
      %v353 = vsel %vm352, %v345, %v140
      %v354 = vsel %vm352, %v343, %v141
    $region42: #{tpu_custom_call.1} parent=1 // loop_footer
      %s137 = sadd.s32 %s135, 1
    $region43: #{tpu_custom_call.1} parent=1 // loop_footer_branch
      %134 = sbr.rel target = $region39
    $region44: #{tpu_custom_call.1} parent=1 // loop_exit
      _
    %v355 = vld [vmem:[#allocation9] sm:$0xff]
    %v356 = vld [vmem:[#allocation9 + $0x8] sm:$0xff]
    %v357 = vld [vmem:[#allocation9 + $0x10] sm:$0xff]
    %v358 = vld [vmem:[#allocation9 + $0x18] sm:$0xff]
    %v359 = vld [vmem:[#allocation9 + $0x20] sm:$0xff]
    %v360 = vld [vmem:[#allocation9 + $0x28] sm:$0xff]
    %v361 = vld [vmem:[#allocation9 + $0x30] sm:$0xff]
    %v362 = vld [vmem:[#allocation9 + $0x38] sm:$0xff]
    %v363 = vld [vmem:[#allocation9 + $0x40] sm:$0xff]
    %v364 = vld [vmem:[#allocation9 + $0x48] sm:$0xff]
    %v365 = vld [vmem:[#allocation9 + $0x50] sm:$0xff]
    %v366 = vld [vmem:[#allocation9 + $0x58] sm:$0xff]
    %v367 = vld [vmem:[#allocation9 + $0x60] sm:$0xff]
    %v368 = vld [vmem:[#allocation9 + $0x68] sm:$0xff]
    %v369 = vld [vmem:[#allocation9 + $0x70] sm:$0xff]
    %v370 = vld [vmem:[#allocation9 + $0x78] sm:$0xff]
    %v371 = vld [vmem:[%s6] sm:$0x1]
    %v373 = vlaneseq
    %v374 = vshrl.u32 %v373, 7
    %v375 = vsub.s32 0, %v374
    %v376 = vrot.slane %v371, %v375
    %378 = vmatprep.subr.mxu0 0.0
    %379 = vmatpush1.msra.mxu0 %v355
    %380 = vmatprep.subr.mxu0 0.0
    %381 = vmatpush1.msra.mxu0 %v356
    %382 = vmatprep.subr.mxu0 0.0
    %383 = vmatpush1.msra.mxu0 %v357
    %384 = vmatprep.subr.mxu0 0.0
    %385 = vmatpush1.msra.mxu0 %v358
    %386 = vmatprep.subr.mxu0 0.0
    %387 = vmatpush1.msra.mxu0 %v359
    %388 = vmatprep.subr.mxu0 0.0
    %389 = vmatpush1.msra.mxu0 %v360
    %390 = vmatprep.subr.mxu0 0.0
    %391 = vmatpush1.msra.mxu0 %v361
    %392 = vmatprep.subr.mxu0 0.0
    %393 = vmatpush1.msra.mxu0 %v362
    %394 = vmatprep.subr.mxu0 0.0
    %395 = vmatpush1.msra.mxu0 %v363
    %396 = vmatprep.subr.mxu0 0.0
    %397 = vmatpush1.msra.mxu0 %v364
    %398 = vmatprep.subr.mxu0 0.0
    %399 = vmatpush1.msra.mxu0 %v365
    %400 = vmatprep.subr.mxu0 0.0
    %401 = vmatpush1.msra.mxu0 %v366
    %402 = vmatprep.subr.mxu0 0.0
    %403 = vmatpush1.msra.mxu0 %v367
    %404 = vmatprep.subr.mxu0 0.0
    %405 = vmatpush1.msra.mxu0 %v368
    %406 = vmatprep.subr.mxu0 0.0
    %407 = vmatpush1.msra.mxu0 %v369
    %408 = vmatprep.subr.mxu0 0.0
    %409 = vmatpush1.msra.mxu0 %v370
    %410 = vmatprep.subr.mxu0 0.0
    %411 = vmatpush1.msra.mxu0 0.0
    %412 = vmatprep.subr.mxu0 0.0
    %413 = vmatpush1.msra.mxu0 0.0
    %414 = vmatprep.subr.mxu0 0.0
    %415 = vmatpush1.msra.mxu0 0.0
    %416 = vmatprep.subr.mxu0 0.0
    %417 = vmatpush1.msra.mxu0 0.0
    %418 = vmatprep.subr.mxu0 0.0
    %419 = vmatpush1.msra.mxu0 0.0
    %420 = vmatprep.subr.mxu0 0.0
    %421 = vmatpush1.msra.mxu0 0.0
    %422 = vmatprep.subr.mxu0 0.0
    %423 = vmatpush1.msra.mxu0 0.0
    %424 = vmatprep.subr.mxu0 0.0
    %425 = vmatpush1.msra.mxu0 0.0
    %426 = vmatprep.subr.mxu0 0.0
    %427 = vmatpush1.msra.mxu0 0.0
    %428 = vmatprep.subr.mxu0 0.0
    %429 = vmatpush1.msra.mxu0 0.0
    %430 = vmatprep.subr.mxu0 0.0
    %431 = vmatpush1.msra.mxu0 0.0
    %432 = vmatprep.subr.mxu0 0.0
    %433 = vmatpush1.msra.mxu0 0.0
    %434 = vmatprep.subr.mxu0 0.0
    %435 = vmatpush1.msra.mxu0 0.0
    %436 = vmatprep.subr.mxu0 0.0
    %437 = vmatpush1.msra.mxu0 0.0
    %438 = vmatprep.subr.mxu0 0.0
    %439 = vmatpush1.msra.mxu0 0.0
    %440 = vmatprep.subr.mxu0 0.0
    %441 = vmatpush1.msra.mxu0 0.0
    %442 = vmatprep.mubr.f32.mxu0 0.0
    %443 = vmatmul.mubr.f32.gmra.mrb[0].mxu0 %v140
    %v444 = vpop.f32.mrb[0].mxu0
    %v445 = vadd.f32 %v376, %v444
    %v446 = vpop.f32.mrb[0].mxu0
    %447 = vdwg.mxu0
    %448 = vst [vmem:[#allocation10] sm:$0xff] %v445
    // Predicated region
    $region45: #{tpu_custom_call.1} parent=1 // pred_check
      _
    $region46: #{tpu_custom_call.1} parent=1 // pred_check_branch
      %450 = sbr.rel (0) target = $region48
    $region47: #{tpu_custom_call.1} parent=1 // pred_region
      %s452 = ssub.s32 128, 128
      %453 = vsyncadd [#allocation6], %s452
      %s455 = sshll.u32 [#allocation10], 4
      %s456 = int_to_ptr.vmem [resolvable:$true] %s455
      %458 = dma.vmem_to_hbm [thread:$0]  %s456, 128, %s7, [#allocation6]
    $region48: #{tpu_custom_call.1} parent=1 // pred_fallthru
      _
    // Predicated region
    $region49: #{tpu_custom_call.1} parent=1 // pred_check
      _
    $region50: #{tpu_custom_call.1} parent=1 // pred_check_branch
      %460 = sbr.rel (0) target = $region52
    $region51: #{tpu_custom_call.1} parent=1 // pred_region
      %461 = dma.done [#allocation6], 128
    $region52: #{tpu_custom_call.1} parent=1 // pred_fallthru
      _
    %462 = vsyncpa [#allocation5], 1
    %463 = vsyncpa [#allocation8], 1
    %464 = vsyncpa [#allocation6], 1

</llo_original>
